<compile_context>
chip_gen: v7x
topology: tpu7x:2x2x1
jax: 0.10.0
libtpu: 0.0.40
codegen_flags: <defaults>
</compile_context>

<pallas_src>
import functools

import jax
import jax.numpy as jnp
from jax.experimental import pallas as pl
from jax.experimental.pallas import tpu as pltpu


def _round_up(x, m):
    return ((x + m - 1) // m) * m


def _vmem_capacity_bytes():
    """Physical VMEM per TensorCore; conservative (v7x = 64 MiB) fallback."""
    try:
        info = pltpu.get_tpu_info()
        cap = getattr(info, "vmem_capacity_bytes", None)
        if cap:
            return int(cap)
    except Exception:
        pass
    return 64 << 20


def _ff_kernel_out_acc(x_ref, w1_ref, b1_ref, w2_ref, b2_ref, o_ref):
    """fp32 output path: accumulate directly into the resident output block."""
    h = pl.program_id(1)
    # bf16 MXU operands, fp32 accumulation.
    hid = jnp.dot(x_ref[...].astype(jnp.bfloat16), w1_ref[...],
                  preferred_element_type=jnp.float32) + b1_ref[...]
    part = jnp.dot(hid.astype(jnp.bfloat16), w2_ref[...],
                   preferred_element_type=jnp.float32)

    @pl.when(h == 0)
    def _():
        o_ref[...] = part + b2_ref[...]

    @pl.when(h != 0)
    def _():
        o_ref[...] += part


def _ff_kernel_scratch(x_ref, w1_ref, b1_ref, w2_ref, b2_ref, o_ref, acc_ref):
    """Non-fp32 output path: fp32 accumulator scratch, single final store."""
    h = pl.program_id(1)
    hid = jnp.dot(x_ref[...].astype(jnp.bfloat16), w1_ref[...],
                  preferred_element_type=jnp.float32) + b1_ref[...]
    part = jnp.dot(hid.astype(jnp.bfloat16), w2_ref[...],
                   preferred_element_type=jnp.float32)

    @pl.when(h == 0)
    def _():
        acc_ref[...] = part + b2_ref[...]

    @pl.when(h != 0)
    def _():
        acc_ref[...] += part

    @pl.when(h == pl.num_programs(1) - 1)
    def _():
        o_ref[...] = acc_ref[...].astype(o_ref.dtype)


def prepare_ff_params(w1_t, b1, w2_t, b2, *, th=512, weight_dtype=jnp.bfloat16):
    """Pad (once, outside the jitted forward) and cast weights for the kernel.

    w1_t: (E, 4E) = W1^T, b1: (4E,), w2_t: (4E, E) = W2^T, b2: (E,).
    Returns padded params and the hidden tile `th` actually used.
    """
    E, H = w1_t.shape
    E_pad = _round_up(E, 128)
    th = min(th, _round_up(H, 128))
    H_pad = _round_up(H, th)

    w1p = jnp.pad(w1_t, ((0, E_pad - E), (0, H_pad - H))).astype(weight_dtype)
    w2p = jnp.pad(w2_t, ((0, H_pad - H), (0, E_pad - E))).astype(weight_dtype)
    # Biases stay fp32 (added to the fp32 accumulator).
    b1p = jnp.pad(b1, (0, H_pad - H)).reshape(1, H_pad).astype(jnp.float32)
    b2p = jnp.pad(b2, (0, E_pad - E)).reshape(1, E_pad).astype(jnp.float32)
    return (w1p, b1p, w2p, b2p), th


@functools.partial(jax.jit, static_argnames=("tm", "th"))
def feed_forward(x, w1p, b1p, w2p, b2p, *, tm=512, th=512):
    """x: (batch, seq, emb). Padded params from prepare_ff_params (th must match).

    tm: row tile (multiple of 256 recommended on v6e/v7x; clipped to row count).
    th: hidden-dim tile (must equal the th returned by prepare_ff_params).
    """
    B, S, E = x.shape
    E_pad, H_pad = w1p.shape
    M = B * S

    tm = min(tm, _round_up(M, 8))
    th = min(th, H_pad)
    M_pad = _round_up(M, tm)

    # Only x is padded per call (weights were padded once, outside jit).
    x2d = jnp.pad(x.reshape(M, E), ((0, M_pad - M), (0, E_pad - E)))

    grid = (M_pad // tm, H_pad // th)
    n_row_tiles = grid[0]

    out_dtype = x.dtype
    fp32_out = (out_dtype == jnp.float32)
    kernel = _ff_kernel_out_acc if fp32_out else _ff_kernel_scratch
    scratch = [] if fp32_out else [pltpu.VMEM((tm, E_pad), jnp.float32)]

    x_item = jnp.dtype(x.dtype).itemsize
    w_item = jnp.dtype(w1p.dtype).itemsize
    out_item = jnp.dtype(out_dtype).itemsize

    # Advisory cost estimate; weights are re-streamed once per row tile.
    cost = pl.CostEstimate(
        flops=4 * M_pad * E_pad * H_pad,          # two matmuls: 2*M*E*H each
        transcendentals=0,
        bytes_accessed=(x_item * M_pad * E_pad
                        + out_item * M_pad * E_pad
                        + w_item * 2 * E_pad * H_pad * n_row_tiles
                        + 4 * (H_pad + E_pad)),
    )

    # VMEM footprint: double-buffered pipelined operands + resident output (+
    # fp32 scratch on the non-fp32 path) + fp32 intermediate headroom.
    vmem_est = (2 * tm * E_pad * x_item
                + 2 * (E_pad * th + th * E_pad) * w_item
                + 2 * (th + E_pad) * 4
                + 2 * tm * E_pad * max(out_item, 4)
                + (0 if fp32_out else tm * E_pad * 4)
                + 2 * tm * th * 4)
    vmem_cap = _vmem_capacity_bytes()
    # Always set the scoped limit explicitly (v5e default is only 16 MiB) and
    # never exceed the chip's physical VMEM minus headroom (v7x: 64 MiB).
    vmem_limit = min(max(vmem_est + (8 << 20), 16 << 20), vmem_cap - (8 << 20))

    out2d = pl.pallas_call(
        kernel,
        out_shape=jax.ShapeDtypeStruct((M_pad, E_pad), out_dtype),
        grid_spec=pltpu.PrefetchScalarGridSpec(
            num_scalar_prefetch=0,
            grid=grid,
            in_specs=[
                pl.BlockSpec((tm, E_pad), lambda i, h: (i, 0)),   # x row tile
                pl.BlockSpec((E_pad, th), lambda i, h: (0, h)),   # W1^T chunk (bf16)
                pl.BlockSpec((1, th),     lambda i, h: (0, h)),   # b1 chunk (f32)
                pl.BlockSpec((th, E_pad), lambda i, h: (h, 0)),   # W2^T chunk (bf16)
                pl.BlockSpec((1, E_pad),  lambda i, h: (0, 0)),   # b2 (f32)
            ],
            out_specs=pl.BlockSpec((tm, E_pad), lambda i, h: (i, 0)),
            scratch_shapes=scratch,
        ),
        compiler_params=pltpu.CompilerParams(
            dimension_semantics=("parallel", "arbitrary"),
            vmem_limit_bytes=int(vmem_limit),
        ),
        cost_estimate=cost,
    )(x2d, w1p, b1p, w2p, b2p)

    return out2d[:M, :E].reshape(B, S, E)


def _ref_ff(x, w1_t, b1, w2_t, b2):
    B, S, E = x.shape
    y = (x.reshape(-1, E) @ w1_t + b1) @ w2_t + b2
    return y.reshape(B, S, E)


def _make_params(key, emb, dtype=jnp.float32):
    hidden = 4 * emb
    k_w1, k_b1, k_w2, k_b2 = jax.random.split(key, 4)
    bound1 = 1.0 / (emb ** 0.5)
    bound2 = 1.0 / (hidden ** 0.5)
    # PyTorch weights are (out, in); store pre-transposed (in, out) for the kernel.
    w1_t = jax.random.uniform(k_w1, (emb, hidden), minval=-bound1, maxval=bound1, dtype=dtype)
    b1 = jax.random.uniform(k_b1, (hidden,), minval=-bound1, maxval=bound1, dtype=dtype)
    w2_t = jax.random.uniform(k_w2, (hidden, emb), minval=-bound2, maxval=bound2, dtype=dtype)
    b2 = jax.random.uniform(k_b2, (emb,), minval=-bound2, maxval=bound2, dtype=dtype)
    return w1_t, b1, w2_t, b2


if __name__ == "__main__":
    key = jax.random.PRNGKey(0)

    # --- Test 1: the toy FeedForward shape (batch=2, seq=8, emb=32) ----------
    batch, seq, emb = 2, 8, 32
    k_x, k_p, key = jax.random.split(key, 3)
    x = jax.random.normal(k_x, (batch, seq, emb), dtype=jnp.float32)
    w1_t, b1, w2_t, b2 = _make_params(k_p, emb)

    padded, th_used = prepare_ff_params(w1_t, b1, w2_t, b2, th=512)
    out = jax.block_until_ready(feed_forward(x, *padded, tm=512, th=th_used))
    ref = _ref_ff(x, w1_t, b1, w2_t, b2)
    # bf16 MXU operands -> looser tolerance than a pure-fp32 reference.
    assert jnp.allclose(out, ref, atol=2e-2, rtol=2e-2), "mismatch vs reference (test 1)"

    # --- Test 2: lane-dense shape exercising the H-tiled accumulator path ----
    batch2, seq2, emb2 = 2, 64, 128
    k_x, k_p, key = jax.random.split(key, 3)
    x2 = jax.random.normal(k_x, (batch2, seq2, emb2), dtype=jnp.float32)
    w1_t2, b1_2, w2_t2, b2_2 = _make_params(k_p, emb2)

    # th=128 forces a 4-step reduction over the hidden axis (grid=(1, 4)).
    padded2, th_used2 = prepare_ff_params(w1_t2, b1_2, w2_t2, b2_2, th=128)
    out2 = jax.block_until_ready(feed_forward(x2, *padded2, tm=128, th=th_used2))
    ref2 = _ref_ff(x2, w1_t2, b1_2, w2_t2, b2_2)
    assert jnp.allclose(out2, ref2, atol=2e-2, rtol=2e-2), "mismatch vs reference (test 2)"

    # --- Test 3: bf16 activations exercise the scratch-accumulator path ------
    x3 = x2.astype(jnp.bfloat16)
    out3 = jax.block_until_ready(feed_forward(x3, *padded2, tm=128, th=th_used2))
    assert jnp.allclose(out3.astype(jnp.float32), ref2, atol=5e-2, rtol=5e-2), \
        "mismatch vs reference (test 3)"

    print("KERNEL_OK")
</pallas_src>

<mosaic_0001>
module attributes {stable_mosaic.version = 11 : i64} {
  func.func @_ff_kernel_out_acc(%arg0: i32, %arg1: i32, %arg2: memref<16x128xf32, #tpu.memory_space<vmem>>, %arg3: memref<128x128xbf16, #tpu.memory_space<vmem>>, %arg4: memref<1x128xf32, #tpu.memory_space<vmem>>, %arg5: memref<128x128xbf16, #tpu.memory_space<vmem>>, %arg6: memref<1x128xf32, #tpu.memory_space<vmem>>, %arg7: memref<16x128xf32, #tpu.memory_space<vmem>>) attributes {dimension_semantics = [#tpu.dimension_semantics<parallel>, #tpu.dimension_semantics<arbitrary>], iteration_bounds = array<i64: 1, 1>, scalar_prefetch = 0 : i64, scratch_operands = 0 : i64, tpu.core_type = #tpu.core_type<tc>, window_params = [{transform_indices = @transform_0, window_bounds = array<i64: 16, 128>}, {transform_indices = @transform_1, window_bounds = array<i64: 128, 128>}, {transform_indices = @transform_2, window_bounds = array<i64: 1, 128>}, {transform_indices = @transform_3, window_bounds = array<i64: 128, 128>}, {pipeline_mode = #tpu.pipeline_mode<synchronous>, transform_indices = @transform_4, window_bounds = array<i64: 1, 128>}, {transform_indices = @transform_5, window_bounds = array<i64: 16, 128>}]} {
    %c0 = arith.constant 0 : index
    %c0_0 = arith.constant 0 : index
    %0 = vector.load %arg2[%c0, %c0_0] : memref<16x128xf32, #tpu.memory_space<vmem>>, vector<16x128xf32>
    %1 = arith.truncf %0 : vector<16x128xf32> to vector<16x128xbf16>
    %c0_1 = arith.constant 0 : index
    %c0_2 = arith.constant 0 : index
    %2 = vector.load %arg3[%c0_1, %c0_2] : memref<128x128xbf16, #tpu.memory_space<vmem>>, vector<128x128xbf16>
    %cst = arith.constant dense<0.000000e+00> : vector<16x128xf32>
    %3 = tpu.matmul %1, %2, %cst {dimension_numbers = #tpu.dot_dimension_numbers<[1], [0], [0], [1], [0, 0, 1, 1], [], []>} : vector<16x128xbf16>, vector<128x128xbf16>, vector<16x128xf32> -> vector<16x128xf32>
    %c0_3 = arith.constant 0 : index
    %c0_4 = arith.constant 0 : index
    %4 = vector.load %arg4[%c0_3, %c0_4] : memref<1x128xf32, #tpu.memory_space<vmem>>, vector<1x128xf32>
    %5 = vector.broadcast %4 : vector<1x128xf32> to vector<16x128xf32>
    %6 = arith.addf %3, %5 : vector<16x128xf32>
    %7 = arith.truncf %6 : vector<16x128xf32> to vector<16x128xbf16>
    %c0_5 = arith.constant 0 : index
    %c0_6 = arith.constant 0 : index
    %8 = vector.load %arg5[%c0_5, %c0_6] : memref<128x128xbf16, #tpu.memory_space<vmem>>, vector<128x128xbf16>
    %cst_7 = arith.constant dense<0.000000e+00> : vector<16x128xf32>
    %9 = tpu.matmul %7, %8, %cst_7 {dimension_numbers = #tpu.dot_dimension_numbers<[1], [0], [0], [1], [0, 0, 1, 1], [], []>} : vector<16x128xbf16>, vector<128x128xbf16>, vector<16x128xf32> -> vector<16x128xf32>
    %c0_i32 = arith.constant 0 : i32
    %10 = arith.cmpi eq, %arg1, %c0_i32 : i32
    %11 = arith.extui %10 : i1 to i32
    %c0_i32_8 = arith.constant 0 : i32
    %12 = arith.cmpi ne, %11, %c0_i32_8 : i32
    scf.if %12 {
      %c0_11 = arith.constant 0 : index
      %c0_12 = arith.constant 0 : index
      %16 = vector.load %arg6[%c0_11, %c0_12] : memref<1x128xf32, #tpu.memory_space<vmem>>, vector<1x128xf32>
      %17 = vector.broadcast %16 : vector<1x128xf32> to vector<16x128xf32>
      %18 = arith.addf %9, %17 : vector<16x128xf32>
      %c0_13 = arith.constant 0 : index
      %c0_14 = arith.constant 0 : index
      %19 = vector.load %arg7[%c0_13, %c0_14] : memref<16x128xf32, #tpu.memory_space<vmem>>, vector<16x128xf32>
      tpu.vector_store %arg7[%c0_13, %c0_14], %18 {strides = array<i32>} : memref<16x128xf32, #tpu.memory_space<vmem>>, vector<16x128xf32>,
    } else {
    }
    %c0_i32_9 = arith.constant 0 : i32
    %13 = arith.cmpi ne, %arg1, %c0_i32_9 : i32
    %14 = arith.extui %13 : i1 to i32
    %c0_i32_10 = arith.constant 0 : i32
    %15 = arith.cmpi ne, %14, %c0_i32_10 : i32
    scf.if %15 {
      %c0_11 = arith.constant 0 : index
      %c0_12 = arith.constant 0 : index
      %16 = vector.load %arg7[%c0_11, %c0_12] : memref<16x128xf32, #tpu.memory_space<vmem>>, vector<16x128xf32>
      %17 = arith.addf %16, %9 : vector<16x128xf32>
      %c0_13 = arith.constant 0 : index
      %c0_14 = arith.constant 0 : index
      %18 = vector.load %arg7[%c0_13, %c0_14] : memref<16x128xf32, #tpu.memory_space<vmem>>, vector<16x128xf32>
      tpu.vector_store %arg7[%c0_13, %c0_14], %17 {strides = array<i32>} : memref<16x128xf32, #tpu.memory_space<vmem>>, vector<16x128xf32>,
    } else {
    }
    return
  }
  func.func @transform_0(%arg0: i32, %arg1: i32) -> (i32, i32) {
    %c0_i32 = arith.constant 0 : i32
    %c0_i32_0 = arith.constant 0 : i32
    return %arg0, %c0_i32 : i32, i32
  }
  func.func @transform_1(%arg0: i32, %arg1: i32) -> (i32, i32) {
    %c0_i32 = arith.constant 0 : i32
    %c0_i32_0 = arith.constant 0 : i32
    return %c0_i32, %arg1 : i32, i32
  }
  func.func @transform_2(%arg0: i32, %arg1: i32) -> (i32, i32) {
    %c0_i32 = arith.constant 0 : i32
    %c0_i32_0 = arith.constant 0 : i32
    return %c0_i32, %arg1 : i32, i32
  }
  func.func @transform_3(%arg0: i32, %arg1: i32) -> (i32, i32) {
    %c0_i32 = arith.constant 0 : i32
    %c0_i32_0 = arith.constant 0 : i32
    return %arg1, %c0_i32 : i32, i32
  }
  func.func @transform_4(%arg0: i32, %arg1: i32) -> (i32, i32) {
    %c0_i32 = arith.constant 0 : i32
    %c0_i32_0 = arith.constant 0 : i32
    %c0_i32_1 = arith.constant 0 : i32
    return %c0_i32, %c0_i32_0 : i32, i32
  }
  func.func @transform_5(%arg0: i32, %arg1: i32) -> (i32, i32) {
    %c0_i32 = arith.constant 0 : i32
    %c0_i32_0 = arith.constant 0 : i32
    return %arg0, %c0_i32 : i32, i32
  }
}

</mosaic_0001>

<llo_original>
// kernel: feed_forward.1
$region0: #{feed_forward.1}
  #allocation0 [shape = 'u32[]', space=smem, size = 0x4, offset = 0x4, fixed_abs, tag = 'smem constant byte address 0x4 - core index']
  #allocation1 [shape = 'u32[144,128]{1,0:T(1,128)}', space=vmem, size = 0x12000, scoped, tag = 'internal scratch']
  %s0 = inlined_call_operand.vmem [shape: f32[16,128], index: 0, kind: input, shape index: {}]
  %s1 = inlined_call_operand.hbm [shape: bf16[128,128], index: 1, kind: input, shape index: {}]
  %s2 = inlined_call_operand.vmem [shape: f32[1,128], index: 2, kind: input, shape index: {}]
  %s3 = inlined_call_operand.hbm [shape: bf16[128,128], index: 3, kind: input, shape index: {}]
  %s4 = inlined_call_operand.vmem [shape: f32[1,128], index: 4, kind: input, shape index: {}]
  %s5 = inlined_call_operand.vmem [shape: f32[16,128], index: 5, kind: output, shape index: {}]
  %s6 = sld [smem:[#allocation0]]
  $region46: #{feed_forward.1} parent=0
    _
  %s8 = ssub.s32 1, %s6
  %s9 = scalar_select 0, %s8, %s6
  $region1: #{feed_forward.1} parent=0
    #allocation2 [shape = 'u8[32768]{0}', space=vmem, size = 0x8000, scoped, tag = 'input window, operand 1, single buffered']
    #allocation3 [shape = 's32[1]{0}', space=sflag, size = 0x4, scoped, tag = 'scoped memory for feed_forward.1']
    #allocation4 [shape = 'u8[32768]{0}', space=vmem, size = 0x8000, scoped, tag = 'input window, operand 3, single buffered']
    #allocation5 [shape = 's32[1]{0}', space=sflag, size = 0x4, scoped, tag = 'scoped memory for feed_forward.1']
    %10 = vsyncpa [#allocation3], 0
    %11 = vsyncpa [#allocation5], 0
    // Predicated region
    $region2: #{feed_forward.1} parent=1 // pred_check
      _
    $region3: #{feed_forward.1} parent=1 // pred_check_branch
      %13 = sbr.rel (0) target = $region5
    $region4: #{feed_forward.1} parent=1 // pred_region
      _
    $region5: #{feed_forward.1} parent=1 // pred_fallthru
      _
    // Predicated region
    $region6: #{feed_forward.1} parent=1 // pred_check
      _
    $region7: #{feed_forward.1} parent=1 // pred_check_branch
      %15 = sbr.rel (0) target = $region9
    $region8: #{feed_forward.1} parent=1 // pred_region
      %s17 = ssub.s32 1024, 1024
      %18 = vsyncadd [#allocation3], %s17
      %s19 = sshll.u32 [#allocation2], 4
      %s20 = int_to_ptr.vmem [resolvable:$true] %s19
      %25 = dma.hbm_to_vmem [thread:$0]  %s1, 1024, %s20, [#allocation3], 64, 64, 4
    $region9: #{feed_forward.1} parent=1 // pred_fallthru
      _
    // Predicated region
    $region10: #{feed_forward.1} parent=1 // pred_check
      _
    $region11: #{feed_forward.1} parent=1 // pred_check_branch
      %27 = sbr.rel (0) target = $region13
    $region12: #{feed_forward.1} parent=1 // pred_region
      _
    $region13: #{feed_forward.1} parent=1 // pred_fallthru
      _
    // Predicated region
    $region14: #{feed_forward.1} parent=1 // pred_check
      _
    $region15: #{feed_forward.1} parent=1 // pred_check_branch
      %29 = sbr.rel (0) target = $region17
    $region16: #{feed_forward.1} parent=1 // pred_region
      %s31 = ssub.s32 1024, 1024
      %32 = vsyncadd [#allocation5], %s31
      %s33 = sshll.u32 [#allocation4], 4
      %s34 = int_to_ptr.vmem [resolvable:$true] %s33
      %39 = dma.hbm_to_vmem [thread:$0]  %s3, 1024, %s34, [#allocation5], 64, 64, 4
    $region17: #{feed_forward.1} parent=1 // pred_fallthru
      _
    // Predicated region
    $region18: #{feed_forward.1} parent=1 // pred_check
      _
    $region19: #{feed_forward.1} parent=1 // pred_check_branch
      %41 = sbr.rel (0) target = $region21
    $region20: #{feed_forward.1} parent=1 // pred_region
      _
    $region21: #{feed_forward.1} parent=1 // pred_fallthru
      _
    // Predicated region
    $region22: #{feed_forward.1} parent=1 // pred_check
      _
    $region23: #{feed_forward.1} parent=1 // pred_check_branch
      %43 = sbr.rel (0) target = $region25
    $region24: #{feed_forward.1} parent=1 // pred_region
      %44 = dma.done [#allocation3], 1024
    $region25: #{feed_forward.1} parent=1 // pred_fallthru
      _
    // Predicated region
    $region26: #{feed_forward.1} parent=1 // pred_check
      _
    $region27: #{feed_forward.1} parent=1 // pred_check_branch
      %46 = sbr.rel (0) target = $region29
    $region28: #{feed_forward.1} parent=1 // pred_region
      %47 = dma.done [#allocation5], 1024
    $region29: #{feed_forward.1} parent=1 // pred_fallthru
      _
    %v49 = vld [vmem:[%s0] sm:$0xff]
    %v50 = vld [vmem:[%s0 + $0x8] sm:$0xff]
    %v51 = vpack.c.bf16 %v50, %v49
    %v52 = vld [vmem:[#allocation2] sm:$0xf]
    %v53 = vld [vmem:[#allocation2 + $0x4] sm:$0xf]
    %v54 = vld [vmem:[#allocation2 + $0x8] sm:$0xf]
    %v55 = vld [vmem:[#allocation2 + $0xc] sm:$0xf]
    %v56 = vld [vmem:[#allocation2 + $0x10] sm:$0xf]
    %v57 = vld [vmem:[#allocation2 + $0x14] sm:$0xf]
    %v58 = vld [vmem:[#allocation2 + $0x18] sm:$0xf]
    %v59 = vld [vmem:[#allocation2 + $0x1c] sm:$0xf]
    %v60 = vld [vmem:[#allocation2 + $0x20] sm:$0xf]
    %v61 = vld [vmem:[#allocation2 + $0x24] sm:$0xf]
    %v62 = vld [vmem:[#allocation2 + $0x28] sm:$0xf]
    %v63 = vld [vmem:[#allocation2 + $0x2c] sm:$0xf]
    %v64 = vld [vmem:[#allocation2 + $0x30] sm:$0xf]
    %v65 = vld [vmem:[#allocation2 + $0x34] sm:$0xf]
    %v66 = vld [vmem:[#allocation2 + $0x38] sm:$0xf]
    %v67 = vld [vmem:[#allocation2 + $0x3c] sm:$0xf]
    %v68 = vld [vmem:[%s2] sm:$0x1]
    %v70 = vlaneseq
    %v71 = vshrl.u32 %v70, 7
    %v72 = vsub.s32 0, %v71
    %v73 = vrot.slane %v68, %v72
    %v91 = vunpack.c.l.b16 %v52
    %v92 = vunpack.c.l.b16 %v53
    %v93 = vunpack.c.l.b16 %v54
    %v94 = vunpack.c.l.b16 %v55
    %v95 = vunpack.c.l.b16 %v56
    %v96 = vunpack.c.l.b16 %v57
    %v97 = vunpack.c.l.b16 %v58
    %v98 = vunpack.c.l.b16 %v59
    %v99 = vunpack.c.l.b16 %v60
    %v100 = vunpack.c.l.b16 %v61
    %v101 = vunpack.c.l.b16 %v62
    %v102 = vunpack.c.l.b16 %v63
    %v103 = vunpack.c.l.b16 %v64
    %v104 = vunpack.c.l.b16 %v65
    %v105 = vunpack.c.l.b16 %v66
    %v106 = vunpack.c.l.b16 %v67
    %v107 = vpack.c.b16 %v92, %v91
    %v108 = vpack.c.b16 %v94, %v93
    %v109 = vpack.c.b16 %v96, %v95
    %v110 = vpack.c.b16 %v98, %v97
    %v111 = vpack.c.b16 %v100, %v99
    %v112 = vpack.c.b16 %v102, %v101
    %v113 = vpack.c.b16 %v104, %v103
    %v114 = vpack.c.b16 %v106, %v105
    %123 = vmatprep.subr.bf16.mxu0 0
    %124 = vmatpush1.bf16.msra.mxu0 %v107
    %125 = vmatprep.subr.bf16.mxu0 0
    %126 = vmatpush1.bf16.msra.mxu0 %v108
    %127 = vmatprep.subr.bf16.mxu0 0
    %128 = vmatpush1.bf16.msra.mxu0 %v109
    %129 = vmatprep.subr.bf16.mxu0 0
    %130 = vmatpush1.bf16.msra.mxu0 %v110
    %131 = vmatprep.subr.bf16.mxu0 0
    %132 = vmatpush1.bf16.msra.mxu0 %v111
    %133 = vmatprep.subr.bf16.mxu0 0
    %134 = vmatpush1.bf16.msra.mxu0 %v112
    %135 = vmatprep.subr.bf16.mxu0 0
    %136 = vmatpush1.bf16.msra.mxu0 %v113
    %137 = vmatprep.subr.bf16.mxu0 0
    %138 = vmatpush1.bf16.msra.mxu0 %v114
    %139 = vmatprep.subr.bf16.mxu0 0
    %140 = vmatpush1.bf16.msra.mxu0 0
    %141 = vmatprep.subr.bf16.mxu0 0
    %142 = vmatpush1.bf16.msra.mxu0 0
    %143 = vmatprep.subr.bf16.mxu0 0
    %144 = vmatpush1.bf16.msra.mxu0 0
    %145 = vmatprep.subr.bf16.mxu0 0
    %146 = vmatpush1.bf16.msra.mxu0 0
    %147 = vmatprep.subr.bf16.mxu0 0
    %148 = vmatpush1.bf16.msra.mxu0 0
    %149 = vmatprep.subr.bf16.mxu0 0
    %150 = vmatpush1.bf16.msra.mxu0 0
    %151 = vmatprep.subr.bf16.mxu0 0
    %152 = vmatpush1.bf16.msra.mxu0 0
    %153 = vmatprep.subr.bf16.mxu0 0
    %154 = vmatpush1.bf16.msra.mxu0 0
    %155 = vmatprep.mubr.bf16.mxu0 0
    %156 = vmatmul.mubr.bf16.gmra.mrb[0].mxu0 %v51
    %v157 = vpop.f32.mrb[0].mxu0
    %v158 = vadd.f32 %v73, %v157
    %v159 = vpop.f32.mrb[0].mxu0
    %v160 = vpop.f32.mrb[0].mxu0
    %v161 = vadd.f32 %v73, %v160
    %v162 = vpop.f32.mrb[0].mxu0
    %163 = vdwg.mxu0
    %v164 = vpack.c.bf16 %v161, %v158
    %v165 = vld [vmem:[#allocation4] sm:$0xf]
    %v166 = vld [vmem:[#allocation4 + $0x4] sm:$0xf]
    %v167 = vld [vmem:[#allocation4 + $0x8] sm:$0xf]
    %v168 = vld [vmem:[#allocation4 + $0xc] sm:$0xf]
    %v169 = vld [vmem:[#allocation4 + $0x10] sm:$0xf]
    %v170 = vld [vmem:[#allocation4 + $0x14] sm:$0xf]
    %v171 = vld [vmem:[#allocation4 + $0x18] sm:$0xf]
    %v172 = vld [vmem:[#allocation4 + $0x1c] sm:$0xf]
    %v173 = vld [vmem:[#allocation4 + $0x20] sm:$0xf]
    %v174 = vld [vmem:[#allocation4 + $0x24] sm:$0xf]
    %v175 = vld [vmem:[#allocation4 + $0x28] sm:$0xf]
    %v176 = vld [vmem:[#allocation4 + $0x2c] sm:$0xf]
    %v177 = vld [vmem:[#allocation4 + $0x30] sm:$0xf]
    %v178 = vld [vmem:[#allocation4 + $0x34] sm:$0xf]
    %v179 = vld [vmem:[#allocation4 + $0x38] sm:$0xf]
    %v180 = vld [vmem:[#allocation4 + $0x3c] sm:$0xf]
    %v197 = vunpack.c.l.b16 %v165
    %v198 = vunpack.c.l.b16 %v166
    %v199 = vunpack.c.l.b16 %v167
    %v200 = vunpack.c.l.b16 %v168
    %v201 = vunpack.c.l.b16 %v169
    %v202 = vunpack.c.l.b16 %v170
    %v203 = vunpack.c.l.b16 %v171
    %v204 = vunpack.c.l.b16 %v172
    %v205 = vunpack.c.l.b16 %v173
    %v206 = vunpack.c.l.b16 %v174
    %v207 = vunpack.c.l.b16 %v175
    %v208 = vunpack.c.l.b16 %v176
    %v209 = vunpack.c.l.b16 %v177
    %v210 = vunpack.c.l.b16 %v178
    %v211 = vunpack.c.l.b16 %v179
    %v212 = vunpack.c.l.b16 %v180
    %v213 = vpack.c.b16 %v198, %v197
    %v214 = vpack.c.b16 %v200, %v199
    %v215 = vpack.c.b16 %v202, %v201
    %v216 = vpack.c.b16 %v204, %v203
    %v217 = vpack.c.b16 %v206, %v205
    %v218 = vpack.c.b16 %v208, %v207
    %v219 = vpack.c.b16 %v210, %v209
    %v220 = vpack.c.b16 %v212, %v211
    %229 = vmatprep.subr.bf16.mxu0 0
    %230 = vmatpush1.bf16.msra.mxu0 %v213
    %231 = vmatprep.subr.bf16.mxu0 0
    %232 = vmatpush1.bf16.msra.mxu0 %v214
    %233 = vmatprep.subr.bf16.mxu0 0
    %234 = vmatpush1.bf16.msra.mxu0 %v215
    %235 = vmatprep.subr.bf16.mxu0 0
    %236 = vmatpush1.bf16.msra.mxu0 %v216
    %237 = vmatprep.subr.bf16.mxu0 0
    %238 = vmatpush1.bf16.msra.mxu0 %v217
    %239 = vmatprep.subr.bf16.mxu0 0
    %240 = vmatpush1.bf16.msra.mxu0 %v218
    %241 = vmatprep.subr.bf16.mxu0 0
    %242 = vmatpush1.bf16.msra.mxu0 %v219
    %243 = vmatprep.subr.bf16.mxu0 0
    %244 = vmatpush1.bf16.msra.mxu0 %v220
    %245 = vmatprep.subr.bf16.mxu0 0
    %246 = vmatpush1.bf16.msra.mxu0 0
    %247 = vmatprep.subr.bf16.mxu0 0
    %248 = vmatpush1.bf16.msra.mxu0 0
    %249 = vmatprep.subr.bf16.mxu0 0
    %250 = vmatpush1.bf16.msra.mxu0 0
    %251 = vmatprep.subr.bf16.mxu0 0
    %252 = vmatpush1.bf16.msra.mxu0 0
    %253 = vmatprep.subr.bf16.mxu0 0
    %254 = vmatpush1.bf16.msra.mxu0 0
    %255 = vmatprep.subr.bf16.mxu0 0
    %256 = vmatpush1.bf16.msra.mxu0 0
    %257 = vmatprep.subr.bf16.mxu0 0
    %258 = vmatpush1.bf16.msra.mxu0 0
    %259 = vmatprep.subr.bf16.mxu0 0
    %260 = vmatpush1.bf16.msra.mxu0 0
    %261 = vmatprep.mubr.bf16.mxu0 0
    %262 = vmatmul.mubr.bf16.gmra.mrb[0].mxu0 %v164
    %v263 = vpop.f32.mrb[0].mxu0
    %v264 = vadd.f32 0.0, %v263
    %v265 = vpop.f32.mrb[0].mxu0
    %v266 = vpop.f32.mrb[0].mxu0
    %v267 = vadd.f32 0.0, %v266
    %v268 = vpop.f32.mrb[0].mxu0
    %269 = vdwg.mxu0
    %p270 = scmp.eq.s32.totalorder 0, 0
    // Predicated region
    $region30: #{feed_forward.1} parent=1 // pred_check
      %p271 = pneg %p270
    $region31: #{feed_forward.1} parent=1 // pred_check_branch
      %273 = sbr.rel (%p271) target = $region33
    $region32: #{feed_forward.1} parent=1 // pred_region
      %v274 = vld [vmem:[%s4] sm:$0x1]
      %v276 = vlaneseq
      %v277 = vshrl.u32 %v276, 7
      %v278 = vsub.s32 0, %v277
      %v279 = vrot.slane %v274, %v278
      %v281 = vadd.f32 %v264, %v279
      %v282 = vadd.f32 %v267, %v279
      %283 = vst [vmem:[%s5] sm:$0xff] %v281
      %284 = vst [vmem:[%s5 + $0x8] sm:$0xff] %v282
    $region33: #{feed_forward.1} parent=1 // pred_fallthru
      _
    %p285 = scmp.ne.s32.totalorder 0, 0
    // Predicated region
    $region34: #{feed_forward.1} parent=1 // pred_check
      %p286 = pneg %p285
    $region35: #{feed_forward.1} parent=1 // pred_check_branch
      %288 = sbr.rel (%p286) target = $region37
    $region36: #{feed_forward.1} parent=1 // pred_region
      %v289 = vld [vmem:[%s5] sm:$0xff]
      %v290 = vld [vmem:[%s5 + $0x8] sm:$0xff]
      %v291 = vadd.f32 %v289, %v264
      %v292 = vadd.f32 %v290, %v267
      %293 = vst [vmem:[%s5] sm:$0xff] %v291
      %294 = vst [vmem:[%s5 + $0x8] sm:$0xff] %v292
    $region37: #{feed_forward.1} parent=1 // pred_fallthru
      _
    // Predicated region
    $region38: #{feed_forward.1} parent=1 // pred_check
      _
    $region39: #{feed_forward.1} parent=1 // pred_check_branch
      %296 = sbr.rel (0) target = $region41
    $region40: #{feed_forward.1} parent=1 // pred_region
      _
    $region41: #{feed_forward.1} parent=1 // pred_fallthru
      _
    // Predicated region
    $region42: #{feed_forward.1} parent=1 // pred_check
      _
    $region43: #{feed_forward.1} parent=1 // pred_check_branch
      %298 = sbr.rel (0) target = $region45
    $region44: #{feed_forward.1} parent=1 // pred_region
      _
    $region45: #{feed_forward.1} parent=1 // pred_fallthru
      _
    %299 = vsyncpa [#allocation3], 1
    %300 = vsyncpa [#allocation5], 1

</llo_original>
